<compile_context>
chip_gen: v6e
topology: v6e:2x2x1
jax: 0.10.0
libtpu: 0.0.40
codegen_flags: <defaults>
</compile_context>

<pallas_src>
import jax
import jax.numpy as jnp
from jax.experimental import pallas as pl
from jax.experimental.pallas import tpu as pltpu


def _round_up(a, b):
    return ((a + b - 1) // b) * b


def _make_mlp_kernel(n_layers, negative_slope=0.01):
    """Kernel: x_ref, w1, b1, ..., wn, bn, out_ref."""

    def kernel(x_ref, *refs):
        out_ref = refs[-1]
        h = x_ref[...]                                   # (TN, D0), compute dtype
        for i in range(n_layers):
            w_ref = refs[2 * i]
            b_ref = refs[2 * i + 1]
            # MXU matmul in the weights' dtype (bf16 fast path), f32 accumulate.
            h = jnp.dot(h.astype(w_ref.dtype), w_ref[...],
                        preferred_element_type=jnp.float32)
            h = h + b_ref[...]                           # bias add in f32
            if i < n_layers - 1:
                h = jnp.where(h > 0, h, negative_slope * h)   # LeakyReLU(0.01)
                # Dropout(p=0.0) is the identity -> nothing to do.
        out_ref[...] = h.astype(out_ref.dtype)

    return kernel


def mlp_forward(x, params, *, batch_tile=1024, use_bf16=True):
    """Fused MLP forward.  params = (w1, b1, ..., wn, bn); w_i has shape (in, out)."""
    assert len(params) % 2 == 0 and len(params) >= 2
    n_layers = len(params) // 2
    N, D0 = x.shape
    assert params[0].shape[0] == D0

    compute_dtype = jnp.bfloat16 if use_bf16 else jnp.float32
    x_c = x.astype(compute_dtype)
    ws = [params[2 * i].astype(compute_dtype) for i in range(n_layers)]
    bs = [params[2 * i + 1].astype(jnp.float32).reshape(1, -1)
          for i in range(n_layers)]
    d_out = ws[-1].shape[1]

    # Large batch tiles amortize per-step overhead; keep the tile a multiple of
    # 8 (sublane) and pad N so the grid divides evenly.
    tile = max(8, min(_round_up(batch_tile, 8), _round_up(N, 8)))
    n_pad = _round_up(N, tile)
    if n_pad != N:
        x_c = jnp.pad(x_c, ((0, n_pad - N), (0, 0)))
    grid = (n_pad // tile,)

    const = lambda i: (0, 0)   # weights / biases: same full block every step
    in_specs = [pl.BlockSpec((tile, D0), lambda i: (i, 0))]
    operands = [x_c]
    for w, b in zip(ws, bs):
        in_specs.append(pl.BlockSpec(w.shape, const))
        in_specs.append(pl.BlockSpec(b.shape, const))
        operands.extend([w, b])

    out = pl.pallas_call(
        _make_mlp_kernel(n_layers),
        out_shape=jax.ShapeDtypeStruct((n_pad, d_out), jnp.float32),
        grid_spec=pltpu.PrefetchScalarGridSpec(
            num_scalar_prefetch=0,
            grid=grid,
            in_specs=in_specs,
            out_specs=pl.BlockSpec((tile, d_out), lambda i: (i, 0)),
        ),
        compiler_params=pltpu.CompilerParams(
            dimension_semantics=("parallel",)),
    )(*operands)
    return out[:N]


def init_params(key, layer_sizes):
    """PyTorch nn.Linear default init; weights stored as (in, out)."""
    params = []
    for i in range(len(layer_sizes) - 1):
        fan_in, fan_out = layer_sizes[i], layer_sizes[i + 1]
        key, kw, kb = jax.random.split(key, 3)
        bound = 1.0 / jnp.sqrt(fan_in)
        w = jax.random.uniform(kw, (fan_in, fan_out), jnp.float32,
                               minval=-bound, maxval=bound)
        b = jax.random.uniform(kb, (fan_out,), jnp.float32,
                               minval=-bound, maxval=bound)
        params.extend([w, b])
    return tuple(params)


def mlp_forward_ref(x, params, *, use_bf16=True):
    """Plain-JAX reference (use_bf16=False == exact PyTorch f32 semantics)."""
    n_layers = len(params) // 2
    cd = jnp.bfloat16 if use_bf16 else jnp.float32
    h = x.astype(jnp.float32)
    for i in range(n_layers):
        w = params[2 * i].astype(cd)
        b = params[2 * i + 1].astype(jnp.float32)
        h = jnp.dot(h.astype(cd), w, preferred_element_type=jnp.float32) + b
        if i < n_layers - 1:
            h = jnp.where(h > 0, h, 0.01 * h)
    return h


if __name__ == "__main__":
    # MLP(layer_sizes=[32, 64, 64, 16]): 3 Linears, LeakyReLU+Dropout(0) after
    # the first two, plain Linear output.
    layer_sizes = [32, 64, 64, 16]

    key = jax.random.PRNGKey(0)
    key, kx = jax.random.split(key)
    params = init_params(key, layer_sizes)

    N = 16
    x = jax.random.normal(kx, (N, layer_sizes[0]), jnp.float32)

    y = mlp_forward(x, params)          # default: bf16 I/O, f32 accumulation
    y = jax.block_until_ready(y)

    ref_bf16 = mlp_forward_ref(x, params, use_bf16=True)    # dtype-matched ref
    ref_f32 = mlp_forward_ref(x, params, use_bf16=False)    # PyTorch-exact ref

    assert y.shape == (N, layer_sizes[-1])
    assert jnp.allclose(y, ref_bf16, atol=2e-3, rtol=2e-3), \
        float(jnp.max(jnp.abs(y - ref_bf16)))
    assert jnp.allclose(y, ref_f32, atol=3e-2, rtol=3e-2), \
        float(jnp.max(jnp.abs(y - ref_f32)))

    print("KERNEL_OK")
</pallas_src>

<mosaic_0001>
module attributes {stable_mosaic.version = 11 : i64} {
  func.func @kernel(%arg0: i32, %arg1: memref<16x32xbf16, #tpu.memory_space<vmem>>, %arg2: memref<32x64xbf16, #tpu.memory_space<vmem>>, %arg3: memref<1x64xf32, #tpu.memory_space<vmem>>, %arg4: memref<64x64xbf16, #tpu.memory_space<vmem>>, %arg5: memref<1x64xf32, #tpu.memory_space<vmem>>, %arg6: memref<64x16xbf16, #tpu.memory_space<vmem>>, %arg7: memref<1x16xf32, #tpu.memory_space<vmem>>, %arg8: memref<16x16xf32, #tpu.memory_space<vmem>>) attributes {dimension_semantics = [#tpu.dimension_semantics<parallel>], iteration_bounds = array<i64: 1>, scalar_prefetch = 0 : i64, scratch_operands = 0 : i64, tpu.core_type = #tpu.core_type<tc>, window_params = [{transform_indices = @transform_0, window_bounds = array<i64: 16, 32>}, {pipeline_mode = #tpu.pipeline_mode<synchronous>, transform_indices = @transform_1, window_bounds = array<i64: 32, 64>}, {pipeline_mode = #tpu.pipeline_mode<synchronous>, transform_indices = @transform_2, window_bounds = array<i64: 1, 64>}, {pipeline_mode = #tpu.pipeline_mode<synchronous>, transform_indices = @transform_3, window_bounds = array<i64: 64, 64>}, {pipeline_mode = #tpu.pipeline_mode<synchronous>, transform_indices = @transform_4, window_bounds = array<i64: 1, 64>}, {pipeline_mode = #tpu.pipeline_mode<synchronous>, transform_indices = @transform_5, window_bounds = array<i64: 64, 16>}, {pipeline_mode = #tpu.pipeline_mode<synchronous>, transform_indices = @transform_6, window_bounds = array<i64: 1, 16>}, {transform_indices = @transform_7, window_bounds = array<i64: 16, 16>}]} {
    %c0 = arith.constant 0 : index
    %c0_0 = arith.constant 0 : index
    %0 = vector.load %arg1[%c0, %c0_0] : memref<16x32xbf16, #tpu.memory_space<vmem>>, vector<16x32xbf16>
    %c0_1 = arith.constant 0 : index
    %c0_2 = arith.constant 0 : index
    %1 = vector.load %arg2[%c0_1, %c0_2] : memref<32x64xbf16, #tpu.memory_space<vmem>>, vector<32x64xbf16>
    %cst = arith.constant dense<0.000000e+00> : vector<16x64xf32>
    %2 = tpu.matmul %0, %1, %cst {dimension_numbers = #tpu.dot_dimension_numbers<[1], [0], [0], [1], [0, 0, 1, 1], [], []>} : vector<16x32xbf16>, vector<32x64xbf16>, vector<16x64xf32> -> vector<16x64xf32>
    %c0_3 = arith.constant 0 : index
    %c0_4 = arith.constant 0 : index
    %3 = vector.load %arg3[%c0_3, %c0_4] : memref<1x64xf32, #tpu.memory_space<vmem>>, vector<1x64xf32>
    %4 = vector.broadcast %3 : vector<1x64xf32> to vector<16x64xf32>
    %5 = arith.addf %2, %4 : vector<16x64xf32>
    %cst_5 = arith.constant 0.000000e+00 : f32
    %6 = vector.broadcast %cst_5 : f32 to vector<16x64xf32>
    %7 = arith.cmpf ogt, %5, %6 : vector<16x64xf32>
    %cst_6 = arith.constant 0.00999999977 : f32
    %8 = vector.broadcast %cst_6 : f32 to vector<16x64xf32>
    %9 = arith.mulf %8, %5 : vector<16x64xf32>
    %10 = arith.select %7, %5, %9 : vector<16x64xi1>, vector<16x64xf32>
    %11 = arith.truncf %10 : vector<16x64xf32> to vector<16x64xbf16>
    %c0_7 = arith.constant 0 : index
    %c0_8 = arith.constant 0 : index
    %12 = vector.load %arg4[%c0_7, %c0_8] : memref<64x64xbf16, #tpu.memory_space<vmem>>, vector<64x64xbf16>
    %cst_9 = arith.constant dense<0.000000e+00> : vector<16x64xf32>
    %13 = tpu.matmul %11, %12, %cst_9 {dimension_numbers = #tpu.dot_dimension_numbers<[1], [0], [0], [1], [0, 0, 1, 1], [], []>} : vector<16x64xbf16>, vector<64x64xbf16>, vector<16x64xf32> -> vector<16x64xf32>
    %c0_10 = arith.constant 0 : index
    %c0_11 = arith.constant 0 : index
    %14 = vector.load %arg5[%c0_10, %c0_11] : memref<1x64xf32, #tpu.memory_space<vmem>>, vector<1x64xf32>
    %15 = vector.broadcast %14 : vector<1x64xf32> to vector<16x64xf32>
    %16 = arith.addf %13, %15 : vector<16x64xf32>
    %cst_12 = arith.constant 0.000000e+00 : f32
    %17 = vector.broadcast %cst_12 : f32 to vector<16x64xf32>
    %18 = arith.cmpf ogt, %16, %17 : vector<16x64xf32>
    %cst_13 = arith.constant 0.00999999977 : f32
    %19 = vector.broadcast %cst_13 : f32 to vector<16x64xf32>
    %20 = arith.mulf %19, %16 : vector<16x64xf32>
    %21 = arith.select %18, %16, %20 : vector<16x64xi1>, vector<16x64xf32>
    %22 = arith.truncf %21 : vector<16x64xf32> to vector<16x64xbf16>
    %c0_14 = arith.constant 0 : index
    %c0_15 = arith.constant 0 : index
    %23 = vector.load %arg6[%c0_14, %c0_15] : memref<64x16xbf16, #tpu.memory_space<vmem>>, vector<64x16xbf16>
    %cst_16 = arith.constant dense<0.000000e+00> : vector<16x16xf32>
    %24 = tpu.matmul %22, %23, %cst_16 {dimension_numbers = #tpu.dot_dimension_numbers<[1], [0], [0], [1], [0, 0, 1, 1], [], []>} : vector<16x64xbf16>, vector<64x16xbf16>, vector<16x16xf32> -> vector<16x16xf32>
    %c0_17 = arith.constant 0 : index
    %c0_18 = arith.constant 0 : index
    %25 = vector.load %arg7[%c0_17, %c0_18] : memref<1x16xf32, #tpu.memory_space<vmem>>, vector<1x16xf32>
    %26 = vector.broadcast %25 : vector<1x16xf32> to vector<16x16xf32>
    %27 = arith.addf %24, %26 : vector<16x16xf32>
    %c0_19 = arith.constant 0 : index
    %c0_20 = arith.constant 0 : index
    %28 = vector.load %arg8[%c0_19, %c0_20] : memref<16x16xf32, #tpu.memory_space<vmem>>, vector<16x16xf32>
    tpu.vector_store %arg8[%c0_19, %c0_20], %27 {strides = array<i32>} : memref<16x16xf32, #tpu.memory_space<vmem>>, vector<16x16xf32>,
    return
  }
  func.func @transform_0(%arg0: i32) -> (i32, i32) {
    %c0_i32 = arith.constant 0 : i32
    %c0_i32_0 = arith.constant 0 : i32
    return %arg0, %c0_i32 : i32, i32
  }
  func.func @transform_1(%arg0: i32) -> (i32, i32) {
    %c0_i32 = arith.constant 0 : i32
    %c0_i32_0 = arith.constant 0 : i32
    %c0_i32_1 = arith.constant 0 : i32
    return %c0_i32, %c0_i32_0 : i32, i32
  }
  func.func @transform_2(%arg0: i32) -> (i32, i32) {
    %c0_i32 = arith.constant 0 : i32
    %c0_i32_0 = arith.constant 0 : i32
    %c0_i32_1 = arith.constant 0 : i32
    return %c0_i32, %c0_i32_0 : i32, i32
  }
  func.func @transform_3(%arg0: i32) -> (i32, i32) {
    %c0_i32 = arith.constant 0 : i32
    %c0_i32_0 = arith.constant 0 : i32
    %c0_i32_1 = arith.constant 0 : i32
    return %c0_i32, %c0_i32_0 : i32, i32
  }
  func.func @transform_4(%arg0: i32) -> (i32, i32) {
    %c0_i32 = arith.constant 0 : i32
    %c0_i32_0 = arith.constant 0 : i32
    %c0_i32_1 = arith.constant 0 : i32
    return %c0_i32, %c0_i32_0 : i32, i32
  }
  func.func @transform_5(%arg0: i32) -> (i32, i32) {
    %c0_i32 = arith.constant 0 : i32
    %c0_i32_0 = arith.constant 0 : i32
    %c0_i32_1 = arith.constant 0 : i32
    return %c0_i32, %c0_i32_0 : i32, i32
  }
  func.func @transform_6(%arg0: i32) -> (i32, i32) {
    %c0_i32 = arith.constant 0 : i32
    %c0_i32_0 = arith.constant 0 : i32
    %c0_i32_1 = arith.constant 0 : i32
    return %c0_i32, %c0_i32_0 : i32, i32
  }
  func.func @transform_7(%arg0: i32) -> (i32, i32) {
    %c0_i32 = arith.constant 0 : i32
    %c0_i32_0 = arith.constant 0 : i32
    return %arg0, %c0_i32 : i32, i32
  }
}

</mosaic_0001>

<llo_original>
// kernel: tpu_custom_call.1
$region0: #{tpu_custom_call.1}
  #allocation0 [shape = 'u32[]', space=smem, size = 0x4, offset = 0x4, fixed_abs, tag = 'smem constant byte address 0x4 - core index']
  #allocation1 [shape = 'u32[144,128]{1,0:T(1,128)}', space=vmem, size = 0x12000, scoped, tag = 'internal scratch']
  %s0 = inlined_call_operand.vmem [shape: bf16[16,32], index: 0, kind: input, shape index: {}]
  %s1 = inlined_call_operand.hbm [shape: bf16[32,64], index: 1, kind: input, shape index: {}]
  %s2 = inlined_call_operand.vmem [shape: f32[1,64], index: 2, kind: input, shape index: {}]
  %s3 = inlined_call_operand.vmem [shape: bf16[64,64], index: 3, kind: input, shape index: {}]
  %s4 = inlined_call_operand.hbm [shape: f32[1,64], index: 4, kind: input, shape index: {}]
  %s5 = inlined_call_operand.vmem [shape: bf16[64,16], index: 5, kind: input, shape index: {}]
  %s6 = inlined_call_operand.vmem [shape: f32[1,16], index: 6, kind: input, shape index: {}]
  %s7 = inlined_call_operand.hbm [shape: f32[16,16], index: 7, kind: output, shape index: {}]
  %s8 = sld [smem:[#allocation0]]
  $region46: #{tpu_custom_call.1} parent=0
    _
  %s10 = ssub.s32 1, %s8
  %s11 = scalar_select 0, %s10, %s8
  $region1: #{tpu_custom_call.1} parent=0
    #allocation2 [shape = 'u8[8192]{0}', space=vmem, size = 0x2000, scoped, tag = 'input window, operand 1, single buffered']
    #allocation3 [shape = 's32[1]{0}', space=sflag, size = 0x4, scoped, tag = 'scoped memory for tpu_custom_call.1']
    #allocation4 [shape = 's32[1]{0}', space=sflag, size = 0x4, scoped, tag = 'scoped memory for tpu_custom_call.1']
    #allocation5 [shape = 'u8[512]{0}', space=vmem, size = 0x400, scoped, tag = 'input window, operand 4, single buffered']
    #allocation6 [shape = 's32[1]{0}', space=sflag, size = 0x4, scoped, tag = 'scoped memory for tpu_custom_call.1']
    #allocation7 [shape = 'u8[8192]{0}', space=vmem, size = 0x2000, scoped, tag = 'output window, operand 0, single buffered']
    %12 = vsyncpa [#allocation3], 0
    %13 = vsyncpa [#allocation6], 0
    %14 = vsyncpa [#allocation4], 0
    // Predicated region
    $region2: #{tpu_custom_call.1} parent=1 // pred_check
      _
    $region3: #{tpu_custom_call.1} parent=1 // pred_check_branch
      %16 = sbr.rel (0) target = $region5
    $region4: #{tpu_custom_call.1} parent=1 // pred_region
      _
    $region5: #{tpu_custom_call.1} parent=1 // pred_fallthru
      _
    // Predicated region
    $region6: #{tpu_custom_call.1} parent=1 // pred_check
      _
    $region7: #{tpu_custom_call.1} parent=1 // pred_check_branch
      %18 = sbr.rel (0) target = $region9
    $region8: #{tpu_custom_call.1} parent=1 // pred_region
      %s20 = ssub.s32 256, 256
      %21 = vsyncadd [#allocation3], %s20
      %s22 = sshll.u32 [#allocation2], 4
      %s23 = int_to_ptr.vmem [resolvable:$true] %s22
      %28 = dma.hbm_to_vmem [thread:$0]  %s1, 256, %s23, [#allocation3], 64, 64, 4
    $region9: #{tpu_custom_call.1} parent=1 // pred_fallthru
      _
    // Predicated region
    $region10: #{tpu_custom_call.1} parent=1 // pred_check
      _
    $region11: #{tpu_custom_call.1} parent=1 // pred_check_branch
      %30 = sbr.rel (0) target = $region13
    $region12: #{tpu_custom_call.1} parent=1 // pred_region
      _
    $region13: #{tpu_custom_call.1} parent=1 // pred_fallthru
      _
    // Predicated region
    $region14: #{tpu_custom_call.1} parent=1 // pred_check
      _
    $region15: #{tpu_custom_call.1} parent=1 // pred_check_branch
      %32 = sbr.rel (0) target = $region17
    $region16: #{tpu_custom_call.1} parent=1 // pred_region
      _
    $region17: #{tpu_custom_call.1} parent=1 // pred_fallthru
      _
    // Predicated region
    $region18: #{tpu_custom_call.1} parent=1 // pred_check
      _
    $region19: #{tpu_custom_call.1} parent=1 // pred_check_branch
      %34 = sbr.rel (0) target = $region21
    $region20: #{tpu_custom_call.1} parent=1 // pred_region
      %s36 = ssub.s32 16, 16
      %37 = vsyncadd [#allocation6], %s36
      %s39 = sshll.u32 [#allocation5], 4
      %s40 = int_to_ptr.vmem [resolvable:$true] %s39
      %42 = dma.hbm_to_vmem [thread:$0]  %s4, 16, %s40, [#allocation6]
    $region21: #{tpu_custom_call.1} parent=1 // pred_fallthru
      _
    // Predicated region
    $region22: #{tpu_custom_call.1} parent=1 // pred_check
      _
    $region23: #{tpu_custom_call.1} parent=1 // pred_check_branch
      %44 = sbr.rel (0) target = $region25
    $region24: #{tpu_custom_call.1} parent=1 // pred_region
      _
    $region25: #{tpu_custom_call.1} parent=1 // pred_fallthru
      _
    // Predicated region
    $region26: #{tpu_custom_call.1} parent=1 // pred_check
      _
    $region27: #{tpu_custom_call.1} parent=1 // pred_check_branch
      %46 = sbr.rel (0) target = $region29
    $region28: #{tpu_custom_call.1} parent=1 // pred_region
      _
    $region29: #{tpu_custom_call.1} parent=1 // pred_fallthru
      _
    // Predicated region
    $region30: #{tpu_custom_call.1} parent=1 // pred_check
      _
    $region31: #{tpu_custom_call.1} parent=1 // pred_check_branch
      %48 = sbr.rel (0) target = $region33
    $region32: #{tpu_custom_call.1} parent=1 // pred_region
      %49 = dma.done [#allocation3], 256
    $region33: #{tpu_custom_call.1} parent=1 // pred_fallthru
      _
    // Predicated region
    $region34: #{tpu_custom_call.1} parent=1 // pred_check
      _
    $region35: #{tpu_custom_call.1} parent=1 // pred_check_branch
      %51 = sbr.rel (0) target = $region37
    $region36: #{tpu_custom_call.1} parent=1 // pred_region
      %52 = dma.done [#allocation6], 16
    $region37: #{tpu_custom_call.1} parent=1 // pred_fallthru
      _
    %v54 = vld [vmem:[%s0] sm:$0xf]
    %v55 = vld [vmem:[%s0 + $0x4] sm:$0xf]
    %v56 = vld [vmem:[#allocation2] sm:$0xf]
    %v57 = vld [vmem:[#allocation2 + $0x4] sm:$0xf]
    %v58 = vld [vmem:[#allocation2 + $0x8] sm:$0xf]
    %v59 = vld [vmem:[#allocation2 + $0xc] sm:$0xf]
    %v60 = vld [vmem:[%s2] sm:$0x1]
    %v62 = vlaneseq
    %v63 = vshrl.u32 %v62, 7
    %v64 = vsub.s32 0, %v63
    %v65 = vrot.slane %v60, %v64
    %v69 = vunpack.c.l.b16 %v54
    %v70 = vunpack.c.l.b16 %v55
    %v71 = vpack.c.b16 %v70, %v69
    %v76 = vunpack.c.l.b16 %v56
    %v77 = vunpack.c.l.b16 %v57
    %v78 = vunpack.c.l.b16 %v58
    %v79 = vunpack.c.l.b16 %v59
    %v80 = vpack.c.b16 %v77, %v76
    %v81 = vpack.c.b16 %v79, %v78
    %vm84 = vcmask 261120
    %v86 = vsel %vm84, %v71, 0
    %88 = vmatprep.subr.bf16.mxu0 0
    %89 = vmatpush1.bf16.msra.mxu0 0
    %90 = vmatprep.subr.bf16.mxu0 0
    %91 = vmatpush1.bf16.msra.mxu0 0
    %92 = vmatprep.subr.bf16.mxu0 0
    %93 = vmatpush1.bf16.msra.mxu0 0
    %94 = vmatprep.subr.bf16.mxu0 0
    %95 = vmatpush1.bf16.msra.mxu0 0
    %96 = vmatprep.subr.bf16.mxu0 0
    %97 = vmatpush1.bf16.msra.mxu0 0
    %98 = vmatprep.subr.bf16.mxu0 0
    %99 = vmatpush1.bf16.msra.mxu0 0
    %100 = vmatprep.subr.bf16.mxu0 0
    %101 = vmatpush1.bf16.msra.mxu0 %v81
    %102 = vmatprep.subr.bf16.mxu0 0
    %103 = vmatpush1.bf16.msra.mxu0 %v80
    %104 = vmatprep.subr.bf16.mxu0 0
    %105 = vmatpush2.bf16.msra.mxu0 0
    %106 = vmatprep.subr.bf16.mxu0 0
    %107 = vmatpush2.bf16.msra.mxu0 0
    %108 = vmatprep.subr.bf16.mxu0 0
    %109 = vmatpush2.bf16.msra.mxu0 0
    %110 = vmatprep.subr.bf16.mxu0 0
    %111 = vmatpush2.bf16.msra.mxu0 0
    %112 = vmatprep.subr.bf16.mxu0 0
    %113 = vmatpush2.bf16.msra.mxu0 0
    %114 = vmatprep.subr.bf16.mxu0 0
    %115 = vmatpush2.bf16.msra.mxu0 0
    %116 = vmatprep.subr.bf16.mxu0 0
    %117 = vmatpush2.bf16.msra.mxu0 0
    %118 = vmatprep.subr.bf16.mxu0 0
    %119 = vmatpush2.bf16.msra.mxu0 0
    %120 = vmatprep.mubr.bf16.mxu0 0
    %121 = vmatmul.mubr.bf16.gmra.mxu0 %v86
    %v122 = vpop.f32.mrf.mxu0
    %v123 = vadd.f32 %v65, %v122
    %v124 = vpop.f32.mrf.mxu0
    %v125 = vpop.f32.mrf.mxu0
    %v126 = vadd.f32 %v65, %v125
    %v127 = vpop.f32.mrf.mxu0
    %128 = vdwg.mxu0
    %vm129 = vcmp.gt.f32.partialorder %v123, 0.0
    %vm130 = vcmp.gt.f32.partialorder %v126, 0.0
    %v131 = vmul.f32 %v123, 0.01
    %v132 = vmul.f32 %v126, 0.01
    %v133 = vsel %vm129, %v123, %v131
    %v134 = vsel %vm130, %v126, %v132
    %v135 = vpack.c.bf16 %v134, %v133
    %v136 = vld [vmem:[%s3] sm:$0xf]
    %v137 = vld [vmem:[%s3 + $0x4] sm:$0xf]
    %v138 = vld [vmem:[%s3 + $0x8] sm:$0xf]
    %v139 = vld [vmem:[%s3 + $0xc] sm:$0xf]
    %v140 = vld [vmem:[%s3 + $0x10] sm:$0xf]
    %v141 = vld [vmem:[%s3 + $0x14] sm:$0xf]
    %v142 = vld [vmem:[%s3 + $0x18] sm:$0xf]
    %v143 = vld [vmem:[%s3 + $0x1c] sm:$0xf]
    %v144 = vld [vmem:[#allocation5] sm:$0x1]
    %v146 = vlaneseq
    %v147 = vshrl.u32 %v146, 7
    %v148 = vsub.s32 0, %v147
    %v149 = vrot.slane %v144, %v148
    %v159 = vunpack.c.l.b16 %v136
    %v160 = vunpack.c.l.b16 %v137
    %v161 = vunpack.c.l.b16 %v138
    %v162 = vunpack.c.l.b16 %v139
    %v163 = vunpack.c.l.b16 %v140
    %v164 = vunpack.c.l.b16 %v141
    %v165 = vunpack.c.l.b16 %v142
    %v166 = vunpack.c.l.b16 %v143
    %v167 = vpack.c.b16 %v160, %v159
    %v168 = vpack.c.b16 %v162, %v161
    %v169 = vpack.c.b16 %v164, %v163
    %v170 = vpack.c.b16 %v166, %v165
    %vm175 = vcmask 523264
    %v177 = vsel %vm175, %v135, 0
    %179 = vmatprep.subr.bf16.mxu0 0
    %180 = vmatpush1.bf16.msra.mxu0 0
    %181 = vmatprep.subr.bf16.mxu0 0
    %182 = vmatpush1.bf16.msra.mxu0 0
    %183 = vmatprep.subr.bf16.mxu0 0
    %184 = vmatpush1.bf16.msra.mxu0 0
    %185 = vmatprep.subr.bf16.mxu0 0
    %186 = vmatpush1.bf16.msra.mxu0 0
    %187 = vmatprep.subr.bf16.mxu0 0
    %188 = vmatpush1.bf16.msra.mxu0 %v170
    %189 = vmatprep.subr.bf16.mxu0 0
    %190 = vmatpush1.bf16.msra.mxu0 %v169
    %191 = vmatprep.subr.bf16.mxu0 0
    %192 = vmatpush1.bf16.msra.mxu0 %v168
    %193 = vmatprep.subr.bf16.mxu0 0
    %194 = vmatpush1.bf16.msra.mxu0 %v167
    %195 = vmatprep.subr.bf16.mxu0 0
    %196 = vmatpush2.bf16.msra.mxu0 0
    %197 = vmatprep.subr.bf16.mxu0 0
    %198 = vmatpush2.bf16.msra.mxu0 0
    %199 = vmatprep.subr.bf16.mxu0 0
    %200 = vmatpush2.bf16.msra.mxu0 0
    %201 = vmatprep.subr.bf16.mxu0 0
    %202 = vmatpush2.bf16.msra.mxu0 0
    %203 = vmatprep.subr.bf16.mxu0 0
    %204 = vmatpush2.bf16.msra.mxu0 0
    %205 = vmatprep.subr.bf16.mxu0 0
    %206 = vmatpush2.bf16.msra.mxu0 0
    %207 = vmatprep.subr.bf16.mxu0 0
    %208 = vmatpush2.bf16.msra.mxu0 0
    %209 = vmatprep.subr.bf16.mxu0 0
    %210 = vmatpush2.bf16.msra.mxu0 0
    %211 = vmatprep.mubr.bf16.mxu0 0
    %212 = vmatmul.mubr.bf16.gmra.mxu0 %v177
    %v213 = vpop.f32.mrf.mxu0
    %v214 = vadd.f32 %v149, %v213
    %v215 = vpop.f32.mrf.mxu0
    %v216 = vpop.f32.mrf.mxu0
    %v217 = vadd.f32 %v149, %v216
    %v218 = vpop.f32.mrf.mxu0
    %219 = vdwg.mxu0
    %vm220 = vcmp.gt.f32.partialorder %v214, 0.0
    %vm221 = vcmp.gt.f32.partialorder %v217, 0.0
    %v222 = vmul.f32 %v214, 0.01
    %v223 = vmul.f32 %v217, 0.01
    %v224 = vsel %vm220, %v214, %v222
    %v225 = vsel %vm221, %v217, %v223
    %v226 = vpack.c.bf16 %v225, %v224
    %v227 = vld [vmem:[%s5] sm:$0xf]
    %v228 = vld [vmem:[%s5 + $0x4] sm:$0xf]
    %v229 = vld [vmem:[%s5 + $0x8] sm:$0xf]
    %v230 = vld [vmem:[%s5 + $0xc] sm:$0xf]
    %v231 = vld [vmem:[%s5 + $0x10] sm:$0xf]
    %v232 = vld [vmem:[%s5 + $0x14] sm:$0xf]
    %v233 = vld [vmem:[%s5 + $0x18] sm:$0xf]
    %v234 = vld [vmem:[%s5 + $0x1c] sm:$0xf]
    %v235 = vld [vmem:[%s6] sm:$0x1]
    %v237 = vlaneseq
    %v238 = vshrl.u32 %v237, 7
    %v239 = vsub.s32 0, %v238
    %v240 = vrot.slane %v235, %v239
    %v250 = vunpack.c.l.b16 %v227
    %v251 = vunpack.c.l.b16 %v228
    %v252 = vunpack.c.l.b16 %v229
    %v253 = vunpack.c.l.b16 %v230
    %v254 = vunpack.c.l.b16 %v231
    %v255 = vunpack.c.l.b16 %v232
    %v256 = vunpack.c.l.b16 %v233
    %v257 = vunpack.c.l.b16 %v234
    %v258 = vpack.c.b16 %v251, %v250
    %v259 = vpack.c.b16 %v253, %v252
    %v260 = vpack.c.b16 %v255, %v254
    %v261 = vpack.c.b16 %v257, %v256
    %v267 = vsel %vm175, %v226, 0
    %269 = vmatprep.subr.bf16.mxu0 0
    %270 = vmatpush1.bf16.msra.mxu0 0
    %271 = vmatprep.subr.bf16.mxu0 0
    %272 = vmatpush1.bf16.msra.mxu0 0
    %273 = vmatprep.subr.bf16.mxu0 0
    %274 = vmatpush1.bf16.msra.mxu0 0
    %275 = vmatprep.subr.bf16.mxu0 0
    %276 = vmatpush1.bf16.msra.mxu0 0
    %277 = vmatprep.subr.bf16.mxu0 0
    %278 = vmatpush1.bf16.msra.mxu0 %v261
    %279 = vmatprep.subr.bf16.mxu0 0
    %280 = vmatpush1.bf16.msra.mxu0 %v260
    %281 = vmatprep.subr.bf16.mxu0 0
    %282 = vmatpush1.bf16.msra.mxu0 %v259
    %283 = vmatprep.subr.bf16.mxu0 0
    %284 = vmatpush1.bf16.msra.mxu0 %v258
    %285 = vmatprep.subr.bf16.mxu0 0
    %286 = vmatpush2.bf16.msra.mxu0 0
    %287 = vmatprep.subr.bf16.mxu0 0
    %288 = vmatpush2.bf16.msra.mxu0 0
    %289 = vmatprep.subr.bf16.mxu0 0
    %290 = vmatpush2.bf16.msra.mxu0 0
    %291 = vmatprep.subr.bf16.mxu0 0
    %292 = vmatpush2.bf16.msra.mxu0 0
    %293 = vmatprep.subr.bf16.mxu0 0
    %294 = vmatpush2.bf16.msra.mxu0 0
    %295 = vmatprep.subr.bf16.mxu0 0
    %296 = vmatpush2.bf16.msra.mxu0 0
    %297 = vmatprep.subr.bf16.mxu0 0
    %298 = vmatpush2.bf16.msra.mxu0 0
    %299 = vmatprep.subr.bf16.mxu0 0
    %300 = vmatpush2.bf16.msra.mxu0 0
    %301 = vmatprep.mubr.bf16.mxu0 0
    %302 = vmatmul.mubr.bf16.gmra.mxu0 %v267
    %v303 = vpop.f32.mrf.mxu0
    %v304 = vadd.f32 %v240, %v303
    %v305 = vpop.f32.mrf.mxu0
    %v306 = vpop.f32.mrf.mxu0
    %v307 = vadd.f32 %v240, %v306
    %v308 = vpop.f32.mrf.mxu0
    %309 = vdwg.mxu0
    %vm310 = vcmask 130048
    %311 = vst.msk [vmem:[#allocation7] sm:$0xff] %vm310, %v304
    %312 = vst.msk [vmem:[#allocation7 + $0x8] sm:$0xff] %vm310, %v307
    // Predicated region
    $region38: #{tpu_custom_call.1} parent=1 // pred_check
      _
    $region39: #{tpu_custom_call.1} parent=1 // pred_check_branch
      %314 = sbr.rel (0) target = $region41
    $region40: #{tpu_custom_call.1} parent=1 // pred_region
      %s316 = ssub.s32 256, 256
      %317 = vsyncadd [#allocation4], %s316
      %s318 = sshll.u32 [#allocation7], 4
      %s319 = int_to_ptr.vmem [resolvable:$true] %s318
      %324 = dma.vmem_to_hbm [thread:$0]  %s319, 256, %s7, [#allocation4], 128, 128, 8
    $region41: #{tpu_custom_call.1} parent=1 // pred_fallthru
      _
    // Predicated region
    $region42: #{tpu_custom_call.1} parent=1 // pred_check
      _
    $region43: #{tpu_custom_call.1} parent=1 // pred_check_branch
      %326 = sbr.rel (0) target = $region45
    $region44: #{tpu_custom_call.1} parent=1 // pred_region
      %327 = dma.done [#allocation4], 256
    $region45: #{tpu_custom_call.1} parent=1 // pred_fallthru
      _
    %328 = vsyncpa [#allocation3], 1
    %329 = vsyncpa [#allocation6], 1
    %330 = vsyncpa [#allocation4], 1

</llo_original>
